<compile_context>
chip_gen: v6e
topology: v6e:2x2x1
jax: 0.10.0
libtpu: 0.0.40
codegen_flags: <defaults>
</compile_context>

<pallas_src>
import functools

import jax
import jax.numpy as jnp
from jax.experimental import pallas as pl
from jax.experimental.pallas import tpu as pltpu

_LANE = 128
_MIB = 1 << 20


def _sigmoid(x):
    # sigmoid(x) == 0.5 * (tanh(x / 2) + 1): one EUP op, no VALU divide.
    return 0.5 * (jnp.tanh(0.5 * x) + 1.0)


def _ipd_kernel(zl_ref, zr_ref, o_ref):
    """One (tm, tn) output tile; full latent dim D in a single block."""
    o_ref[...] = _sigmoid(
        jnp.dot(zl_ref[...], zr_ref[...], preferred_element_type=jnp.float32)
    ).astype(o_ref.dtype)


def _ipd_kernel_ktiled(zl_ref, zr_ref, o_ref, acc_ref):
    """Fallback for very large D: grid axis 2 reduces over the latent dim."""
    k = pl.program_id(2)

    @pl.when(k == 0)
    def _():
        acc_ref[...] = jnp.zeros_like(acc_ref)

    acc_ref[...] += jnp.dot(
        zl_ref[...], zr_ref[...], preferred_element_type=jnp.float32
    )

    @pl.when(k == pl.num_programs(2) - 1)
    def _():
        o_ref[...] = _sigmoid(acc_ref[...]).astype(o_ref.dtype)


def _round_up(x, m):
    return ((x + m - 1) // m) * m


def _pick_tile(n, target):
    """Largest tile <= target that is a multiple of 128 and divides n.

    n must be a multiple of 128, so this never falls back to a full-extent
    block; bigger candidates are tried first.
    """
    candidates = sorted({int(target)} | {128 << k for k in range(8)}, reverse=True)
    for c in candidates:
        if 128 <= c <= min(n, target) and c % 128 == 0 and n % c == 0:
            return c
    return 128


@functools.partial(
    jax.jit,
    static_argnames=("tm", "tn", "out_dtype", "max_single_block_d",
                     "vmem_budget_bytes"),
)
def inner_product_decoder(z, *, tm=512, tn=2048, out_dtype=None,
                          max_single_block_d=1024,
                          vmem_budget_bytes=28 * _MIB):
    """adj = sigmoid(z @ z.T).  z: (N, D); adj: (N, N).

    out_dtype: output dtype (default z.dtype).  Passing jnp.bfloat16 halves
    the N*N store stream, which is the roofline of this kernel.
    """
    N, D = z.shape
    out_dtype = z.dtype if out_dtype is None else jnp.dtype(out_dtype)
    z_size = jnp.dtype(z.dtype).itemsize
    o_size = jnp.dtype(out_dtype).itemsize

    # Pad N (and D on the K-tiled path) up to a multiple of 128.  Zero padding
    # is exact for z @ z.T; padded rows/cols of the output are sliced off.
    N_pad = _round_up(N, _LANE)

    tm = _pick_tile(N_pad, tm)
    tn = _pick_tile(N_pad, tn)

    if D <= max_single_block_d:
        # ---- single-block-D fast path: 2-D grid, sigmoid fused into store ----
        def ws(tm_, tn_):
            # double-buffered zl + zr + out tiles
            return 2 * (tm_ * D * z_size + D * tn_ * z_size + tm_ * tn_ * o_size)

        while ws(tm, tn) > vmem_budget_bytes and (tm > 128 or tn > 128):
            if tn >= tm and tn > 128:
                tn = _pick_tile(N_pad, tn // 2)
            else:
                tm = _pick_tile(N_pad, tm // 2)

        zp = jnp.pad(z, ((0, N_pad - N), (0, 0))) if N_pad != N else z
        ztp = zp.T  # (D, N_pad): canonical [K, N] MXU feed, transposed once.

        gi = N_pad // tm
        gj = N_pad // tn
        vmem_limit = int(min(max(32 * _MIB, ws(tm, tn) + 8 * _MIB), 48 * _MIB))

        cost = pl.CostEstimate(
            flops=2 * N_pad * N_pad * D,
            transcendentals=N_pad * N_pad,
            bytes_accessed=N_pad * N_pad * o_size + 2 * N_pad * D * z_size,
        )

        adj = pl.pallas_call(
            _ipd_kernel,
            out_shape=jax.ShapeDtypeStruct((N_pad, N_pad), out_dtype),
            grid_spec=pltpu.PrefetchScalarGridSpec(
                num_scalar_prefetch=0,
                # j (column block) outer, i (row block) inner: the (D, tn)
                # z.T block index is constant across the inner sweep, so z.T
                # is read from HBM exactly once.
                grid=(gj, gi),
                in_specs=[
                    pl.BlockSpec((tm, D), lambda j, i: (i, 0)),
                    pl.BlockSpec((D, tn), lambda j, i: (0, j)),
                ],
                out_specs=pl.BlockSpec((tm, tn), lambda j, i: (i, j)),
            ),
            compiler_params=pltpu.CompilerParams(
                dimension_semantics=("parallel", "parallel"),
                vmem_limit_bytes=vmem_limit,
            ),
            cost_estimate=cost,
        )(zp, ztp)

    else:
        # ---- large-D fallback: tile the contraction with an fp32 accumulator ----
        D_pad = _round_up(D, _LANE)
        tk = _pick_tile(D_pad, 512)

        def ws(tm_, tn_, tk_):
            return (tm_ * tn_ * 4                                   # accumulator
                    + 2 * (tm_ * tk_ + tk_ * tn_) * z_size          # inputs
                    + 2 * tm_ * tn_ * o_size)                       # output

        while ws(tm, tn, tk) > vmem_budget_bytes and (tk > 128 or tn > 128 or tm > 128):
            if tk > 128:
                tk = _pick_tile(D_pad, tk // 2)
            elif tn >= tm and tn > 128:
                tn = _pick_tile(N_pad, tn // 2)
            else:
                tm = _pick_tile(N_pad, tm // 2)

        if N_pad != N or D_pad != D:
            zp = jnp.pad(z, ((0, N_pad - N), (0, D_pad - D)))
        else:
            zp = z
        ztp = zp.T  # (D_pad, N_pad)

        vmem_limit = int(min(max(32 * _MIB, ws(tm, tn, tk) + 8 * _MIB), 48 * _MIB))

        cost = pl.CostEstimate(
            flops=2 * N_pad * N_pad * D_pad,
            transcendentals=N_pad * N_pad,
            bytes_accessed=N_pad * N_pad * o_size + 2 * N_pad * D_pad * z_size,
        )

        adj = pl.pallas_call(
            _ipd_kernel_ktiled,
            out_shape=jax.ShapeDtypeStruct((N_pad, N_pad), out_dtype),
            grid_spec=pltpu.PrefetchScalarGridSpec(
                num_scalar_prefetch=0,
                grid=(N_pad // tn, N_pad // tm, D_pad // tk),
                in_specs=[
                    pl.BlockSpec((tm, tk), lambda j, i, k: (i, k)),
                    pl.BlockSpec((tk, tn), lambda j, i, k: (k, j)),
                ],
                out_specs=pl.BlockSpec((tm, tn), lambda j, i, k: (i, j)),
                scratch_shapes=[pltpu.VMEM((tm, tn), jnp.float32)],
            ),
            compiler_params=pltpu.CompilerParams(
                dimension_semantics=("parallel", "parallel", "arbitrary"),
                vmem_limit_bytes=vmem_limit,
            ),
            cost_estimate=cost,
        )(zp, ztp)

    if N_pad != N:
        adj = adj[:N, :N]
    return adj


if __name__ == "__main__":
    key = jax.random.PRNGKey(0)
    # small GAE-like latent embedding: N nodes x D latent dims
    N, D = 256, 32
    z = jax.random.normal(key, (N, D), dtype=jnp.float32)

    adj = inner_product_decoder(z)
    jax.block_until_ready(adj)

    # reference check (plain JAX)
    adj_ref = jax.nn.sigmoid(z @ z.T)
    assert adj.shape == (N, N)
    assert jnp.allclose(adj, adj_ref, atol=1e-5, rtol=1e-5), "mismatch vs reference"

    # also exercise a non-multiple-of-128 N (padding path) at tiny size
    N2 = 200
    z2 = jax.random.normal(jax.random.PRNGKey(1), (N2, D), dtype=jnp.float32)
    adj2 = inner_product_decoder(z2)
    jax.block_until_ready(adj2)
    adj2_ref = jax.nn.sigmoid(z2 @ z2.T)
    assert adj2.shape == (N2, N2)
    assert jnp.allclose(adj2, adj2_ref, atol=1e-5, rtol=1e-5), "mismatch vs reference (padded)"

    print("KERNEL_OK")
</pallas_src>

<mosaic_0001>
module attributes {stable_mosaic.version = 11 : i64} {
  func.func @_ipd_kernel(%arg0: i32, %arg1: i32, %arg2: memref<256x32xf32, #tpu.memory_space<vmem>>, %arg3: memref<32x256xf32, #tpu.memory_space<vmem>>, %arg4: memref<256x256xf32, #tpu.memory_space<vmem>>) attributes {dimension_semantics = [#tpu.dimension_semantics<parallel>, #tpu.dimension_semantics<parallel>], iteration_bounds = array<i64: 1, 1>, scalar_prefetch = 0 : i64, scratch_operands = 0 : i64, tpu.core_type = #tpu.core_type<tc>, window_params = [{transform_indices = @transform_0, window_bounds = array<i64: 256, 32>}, {transform_indices = @transform_1, window_bounds = array<i64: 32, 256>}, {transform_indices = @transform_2, window_bounds = array<i64: 256, 256>}]} {
    %c0 = arith.constant 0 : index
    %c0_0 = arith.constant 0 : index
    %0 = vector.load %arg2[%c0, %c0_0] : memref<256x32xf32, #tpu.memory_space<vmem>>, vector<256x32xf32>
    %c0_1 = arith.constant 0 : index
    %c0_2 = arith.constant 0 : index
    %1 = vector.load %arg3[%c0_1, %c0_2] : memref<32x256xf32, #tpu.memory_space<vmem>>, vector<32x256xf32>
    %cst = arith.constant dense<0.000000e+00> : vector<256x256xf32>
    %2 = tpu.matmul %0, %1, %cst {dimension_numbers = #tpu.dot_dimension_numbers<[1], [0], [0], [1], [0, 0, 1, 1], [], []>} : vector<256x32xf32>, vector<32x256xf32>, vector<256x256xf32> -> vector<256x256xf32>
    %cst_3 = arith.constant 5.000000e-01 : f32
    %3 = vector.broadcast %cst_3 : f32 to vector<256x256xf32>
    %4 = arith.mulf %3, %2 : vector<256x256xf32>
    %5 = math.tanh %4 : vector<256x256xf32>
    %cst_4 = arith.constant 1.000000e+00 : f32
    %6 = vector.broadcast %cst_4 : f32 to vector<256x256xf32>
    %7 = arith.addf %5, %6 : vector<256x256xf32>
    %cst_5 = arith.constant 5.000000e-01 : f32
    %8 = vector.broadcast %cst_5 : f32 to vector<256x256xf32>
    %9 = arith.mulf %8, %7 : vector<256x256xf32>
    %c0_6 = arith.constant 0 : index
    %c0_7 = arith.constant 0 : index
    %10 = vector.load %arg4[%c0_6, %c0_7] : memref<256x256xf32, #tpu.memory_space<vmem>>, vector<256x256xf32>
    tpu.vector_store %arg4[%c0_6, %c0_7], %9 {strides = array<i32>} : memref<256x256xf32, #tpu.memory_space<vmem>>, vector<256x256xf32>,
    return
  }
  func.func @transform_0(%arg0: i32, %arg1: i32) -> (i32, i32) {
    %c0_i32 = arith.constant 0 : i32
    %c0_i32_0 = arith.constant 0 : i32
    return %arg1, %c0_i32 : i32, i32
  }
  func.func @transform_1(%arg0: i32, %arg1: i32) -> (i32, i32) {
    %c0_i32 = arith.constant 0 : i32
    %c0_i32_0 = arith.constant 0 : i32
    return %c0_i32, %arg0 : i32, i32
  }
  func.func @transform_2(%arg0: i32, %arg1: i32) -> (i32, i32) {
    %c0_i32 = arith.constant 0 : i32
    return %arg1, %arg0 : i32, i32
  }
}

</mosaic_0001>

<llo_original>
// kernel: inner_product_decoder.1
$region0: #{inner_product_decoder.1}
  #allocation0 [shape = 'u32[]', space=smem, size = 0x4, offset = 0x4, fixed_abs, tag = 'smem constant byte address 0x4 - core index']
  #allocation1 [shape = 'u32[144,128]{1,0:T(1,128)}', space=vmem, size = 0x12000, scoped, tag = 'internal scratch']
  %s0 = inlined_call_operand.vmem [shape: f32[256,32], index: 0, kind: input, shape index: {}]
  %s1 = inlined_call_operand.vmem [shape: f32[32,256], index: 1, kind: input, shape index: {}]
  %s2 = inlined_call_operand.hbm [shape: f32[256,256], index: 2, kind: output, shape index: {}]
  %s3 = sld [smem:[#allocation0]]
  $region18: #{inner_product_decoder.1} parent=0
    _
  %s5 = ssub.s32 1, %s3
  %s6 = scalar_select 0, %s5, %s3
  $region1: #{inner_product_decoder.1} parent=0
    #allocation2 [shape = 'u8[262144]{0}', space=vmem, size = 0x40000, scoped, tag = 'output window, operand 0, single buffered']
    #allocation3 [shape = 's32[1]{0}', space=sflag, size = 0x4, scoped, tag = 'scoped memory for inner_product_decoder.1']
    %7 = vsyncpa [#allocation3], 0
    // Predicated region
    $region2: #{inner_product_decoder.1} parent=1 // pred_check
      _
    $region3: #{inner_product_decoder.1} parent=1 // pred_check_branch
      %9 = sbr.rel (0) target = $region5
    $region4: #{inner_product_decoder.1} parent=1 // pred_region
      _
    $region5: #{inner_product_decoder.1} parent=1 // pred_fallthru
      _
    // Predicated region
    $region6: #{inner_product_decoder.1} parent=1 // pred_check
      _
    $region7: #{inner_product_decoder.1} parent=1 // pred_check_branch
      %11 = sbr.rel (0) target = $region9
    $region8: #{inner_product_decoder.1} parent=1 // pred_region
      _
    $region9: #{inner_product_decoder.1} parent=1 // pred_fallthru
      _
    %v12 = vld [vmem:[%s0] sm:$0xff]
    %v13 = vld [vmem:[%s0 + $0x8] sm:$0xff]
    %v14 = vld [vmem:[%s0 + $0x10] sm:$0xff]
    %v15 = vld [vmem:[%s0 + $0x18] sm:$0xff]
    %v16 = vld [vmem:[%s0 + $0x20] sm:$0xff]
    %v17 = vld [vmem:[%s0 + $0x28] sm:$0xff]
    %v18 = vld [vmem:[%s0 + $0x30] sm:$0xff]
    %v19 = vld [vmem:[%s0 + $0x38] sm:$0xff]
    %v20 = vld [vmem:[%s0 + $0x40] sm:$0xff]
    %v21 = vld [vmem:[%s0 + $0x48] sm:$0xff]
    %v22 = vld [vmem:[%s0 + $0x50] sm:$0xff]
    %v23 = vld [vmem:[%s0 + $0x58] sm:$0xff]
    %v24 = vld [vmem:[%s0 + $0x60] sm:$0xff]
    %v25 = vld [vmem:[%s0 + $0x68] sm:$0xff]
    %v26 = vld [vmem:[%s0 + $0x70] sm:$0xff]
    %v27 = vld [vmem:[%s0 + $0x78] sm:$0xff]
    %v28 = vld [vmem:[%s0 + $0x80] sm:$0xff]
    %v29 = vld [vmem:[%s0 + $0x88] sm:$0xff]
    %v30 = vld [vmem:[%s0 + $0x90] sm:$0xff]
    %v31 = vld [vmem:[%s0 + $0x98] sm:$0xff]
    %v32 = vld [vmem:[%s0 + $0xa0] sm:$0xff]
    %v33 = vld [vmem:[%s0 + $0xa8] sm:$0xff]
    %v34 = vld [vmem:[%s0 + $0xb0] sm:$0xff]
    %v35 = vld [vmem:[%s0 + $0xb8] sm:$0xff]
    %v36 = vld [vmem:[%s0 + $0xc0] sm:$0xff]
    %v37 = vld [vmem:[%s0 + $0xc8] sm:$0xff]
    %v38 = vld [vmem:[%s0 + $0xd0] sm:$0xff]
    %v39 = vld [vmem:[%s0 + $0xd8] sm:$0xff]
    %v40 = vld [vmem:[%s0 + $0xe0] sm:$0xff]
    %v41 = vld [vmem:[%s0 + $0xe8] sm:$0xff]
    %v42 = vld [vmem:[%s0 + $0xf0] sm:$0xff]
    %v43 = vld [vmem:[%s0 + $0xf8] sm:$0xff]
    %v44 = vld [vmem:[%s1] sm:$0xff]
    %v45 = vld [vmem:[%s1 + $0x8] sm:$0xff]
    %v46 = vld [vmem:[%s1 + $0x10] sm:$0xff]
    %v47 = vld [vmem:[%s1 + $0x18] sm:$0xff]
    %v48 = vld [vmem:[%s1 + $0x20] sm:$0xff]
    %v49 = vld [vmem:[%s1 + $0x28] sm:$0xff]
    %v50 = vld [vmem:[%s1 + $0x30] sm:$0xff]
    %v51 = vld [vmem:[%s1 + $0x38] sm:$0xff]
    %vm52 = vcmask 261120
    %v54 = vsel %vm52, %v12, 0
    %v57 = vsel %vm52, %v13, 0
    %v60 = vsel %vm52, %v14, 0
    %v63 = vsel %vm52, %v15, 0
    %v66 = vsel %vm52, %v16, 0
    %v69 = vsel %vm52, %v17, 0
    %v72 = vsel %vm52, %v18, 0
    %v75 = vsel %vm52, %v19, 0
    %v78 = vsel %vm52, %v20, 0
    %v81 = vsel %vm52, %v21, 0
    %v84 = vsel %vm52, %v22, 0
    %v87 = vsel %vm52, %v23, 0
    %v90 = vsel %vm52, %v24, 0
    %v93 = vsel %vm52, %v25, 0
    %v96 = vsel %vm52, %v26, 0
    %v99 = vsel %vm52, %v27, 0
    %v102 = vsel %vm52, %v28, 0
    %v105 = vsel %vm52, %v29, 0
    %v108 = vsel %vm52, %v30, 0
    %v111 = vsel %vm52, %v31, 0
    %v114 = vsel %vm52, %v32, 0
    %v117 = vsel %vm52, %v33, 0
    %v120 = vsel %vm52, %v34, 0
    %v123 = vsel %vm52, %v35, 0
    %v126 = vsel %vm52, %v36, 0
    %v129 = vsel %vm52, %v37, 0
    %v132 = vsel %vm52, %v38, 0
    %v135 = vsel %vm52, %v39, 0
    %v138 = vsel %vm52, %v40, 0
    %v141 = vsel %vm52, %v41, 0
    %v144 = vsel %vm52, %v42, 0
    %v147 = vsel %vm52, %v43, 0
    %149 = vmatprep.subr.mxu0 0.0
    %150 = vmatpush1.msra.mxu0 0.0
    %151 = vmatprep.subr.mxu0 0.0
    %152 = vmatpush1.msra.mxu0 0.0
    %153 = vmatprep.subr.mxu0 0.0
    %154 = vmatpush1.msra.mxu0 0.0
    %155 = vmatprep.subr.mxu0 0.0
    %156 = vmatpush1.msra.mxu0 0.0
    %157 = vmatprep.subr.mxu0 0.0
    %158 = vmatpush1.msra.mxu0 0.0
    %159 = vmatprep.subr.mxu0 0.0
    %160 = vmatpush1.msra.mxu0 0.0
    %161 = vmatprep.subr.mxu0 0.0
    %162 = vmatpush1.msra.mxu0 0.0
    %163 = vmatprep.subr.mxu0 0.0
    %164 = vmatpush1.msra.mxu0 0.0
    %165 = vmatprep.subr.mxu0 0.0
    %166 = vmatpush1.msra.mxu0 0.0
    %167 = vmatprep.subr.mxu0 0.0
    %168 = vmatpush1.msra.mxu0 0.0
    %169 = vmatprep.subr.mxu0 0.0
    %170 = vmatpush1.msra.mxu0 0.0
    %171 = vmatprep.subr.mxu0 0.0
    %172 = vmatpush1.msra.mxu0 0.0
    %173 = vmatprep.subr.mxu0 %v51
    %174 = vmatpush1.msra.mxu0 %v50
    %175 = vmatprep.subr.mxu0 %v49
    %176 = vmatpush1.msra.mxu0 %v48
    %177 = vmatprep.subr.mxu0 %v47
    %178 = vmatpush1.msra.mxu0 %v46
    %179 = vmatprep.subr.mxu0 %v45
    %180 = vmatpush1.msra.mxu0 %v44
    %181 = vmatprep.subr.mxu0 0.0
    %182 = vmatpush2.msra.mxu0 0.0
    %183 = vmatprep.subr.mxu0 0.0
    %184 = vmatpush2.msra.mxu0 0.0
    %185 = vmatprep.subr.mxu0 0.0
    %186 = vmatpush2.msra.mxu0 0.0
    %187 = vmatprep.subr.mxu0 0.0
    %188 = vmatpush2.msra.mxu0 0.0
    %189 = vmatprep.subr.mxu0 0.0
    %190 = vmatpush2.msra.mxu0 0.0
    %191 = vmatprep.subr.mxu0 0.0
    %192 = vmatpush2.msra.mxu0 0.0
    %193 = vmatprep.subr.mxu0 0.0
    %194 = vmatpush2.msra.mxu0 0.0
    %195 = vmatprep.subr.mxu0 0.0
    %196 = vmatpush2.msra.mxu0 0.0
    %197 = vmatprep.subr.mxu0 0.0
    %198 = vmatpush2.msra.mxu0 0.0
    %199 = vmatprep.subr.mxu0 0.0
    %200 = vmatpush2.msra.mxu0 0.0
    %201 = vmatprep.subr.mxu0 0.0
    %202 = vmatpush2.msra.mxu0 0.0
    %203 = vmatprep.subr.mxu0 0.0
    %204 = vmatpush2.msra.mxu0 0.0
    %205 = vmatprep.subr.mxu0 0.0
    %206 = vmatpush2.msra.mxu0 0.0
    %207 = vmatprep.subr.mxu0 0.0
    %208 = vmatpush2.msra.mxu0 0.0
    %209 = vmatprep.subr.mxu0 0.0
    %210 = vmatpush2.msra.mxu0 0.0
    %211 = vmatprep.subr.mxu0 0.0
    %212 = vmatpush2.msra.mxu0 0.0
    %213 = vmatprep.mubr.f32.mxu0 0.0
    %214 = vmatmul.mubr.f32.gmra.mxu0 %v54
    %v215 = vpop.f32.mrf.mxu0
    %v216 = vadd.f32 0.0, %v215
    %v217 = vpop.f32.mrf.mxu0
    %v218 = vadd.f32 0.0, %v217
    %219 = vmatprep.mubr.f32.mxu0 0.0
    %220 = vmatmul.mubr.f32.gmra.mxu0 %v57
    %v221 = vpop.f32.mrf.mxu0
    %v222 = vadd.f32 0.0, %v221
    %v223 = vpop.f32.mrf.mxu0
    %v224 = vadd.f32 0.0, %v223
    %225 = vmatprep.mubr.f32.mxu0 0.0
    %226 = vmatmul.mubr.f32.gmra.mxu0 %v60
    %v227 = vpop.f32.mrf.mxu0
    %v228 = vadd.f32 0.0, %v227
    %v229 = vpop.f32.mrf.mxu0
    %v230 = vadd.f32 0.0, %v229
    %231 = vmatprep.mubr.f32.mxu0 0.0
    %232 = vmatmul.mubr.f32.gmra.mxu0 %v63
    %v233 = vpop.f32.mrf.mxu0
    %v234 = vadd.f32 0.0, %v233
    %v235 = vpop.f32.mrf.mxu0
    %v236 = vadd.f32 0.0, %v235
    %237 = vmatprep.mubr.f32.mxu0 0.0
    %238 = vmatmul.mubr.f32.gmra.mxu0 %v66
    %v239 = vpop.f32.mrf.mxu0
    %v240 = vadd.f32 0.0, %v239
    %v241 = vpop.f32.mrf.mxu0
    %v242 = vadd.f32 0.0, %v241
    %243 = vmatprep.mubr.f32.mxu0 0.0
    %244 = vmatmul.mubr.f32.gmra.mxu0 %v69
    %v245 = vpop.f32.mrf.mxu0
    %v246 = vadd.f32 0.0, %v245
    %v247 = vpop.f32.mrf.mxu0
    %v248 = vadd.f32 0.0, %v247
    %249 = vmatprep.mubr.f32.mxu0 0.0
    %250 = vmatmul.mubr.f32.gmra.mxu0 %v72
    %v251 = vpop.f32.mrf.mxu0
    %v252 = vadd.f32 0.0, %v251
    %v253 = vpop.f32.mrf.mxu0
    %v254 = vadd.f32 0.0, %v253
    %255 = vmatprep.mubr.f32.mxu0 0.0
    %256 = vmatmul.mubr.f32.gmra.mxu0 %v75
    %v257 = vpop.f32.mrf.mxu0
    %v258 = vadd.f32 0.0, %v257
    %v259 = vpop.f32.mrf.mxu0
    %v260 = vadd.f32 0.0, %v259
    %261 = vmatprep.mubr.f32.mxu0 0.0
    %262 = vmatmul.mubr.f32.gmra.mxu0 %v78
    %v263 = vpop.f32.mrf.mxu0
    %v264 = vadd.f32 0.0, %v263
    %v265 = vpop.f32.mrf.mxu0
    %v266 = vadd.f32 0.0, %v265
    %267 = vmatprep.mubr.f32.mxu0 0.0
    %268 = vmatmul.mubr.f32.gmra.mxu0 %v81
    %v269 = vpop.f32.mrf.mxu0
    %v270 = vadd.f32 0.0, %v269
    %v271 = vpop.f32.mrf.mxu0
    %v272 = vadd.f32 0.0, %v271
    %273 = vmatprep.mubr.f32.mxu0 0.0
    %274 = vmatmul.mubr.f32.gmra.mxu0 %v84
    %v275 = vpop.f32.mrf.mxu0
    %v276 = vadd.f32 0.0, %v275
    %v277 = vpop.f32.mrf.mxu0
    %v278 = vadd.f32 0.0, %v277
    %279 = vmatprep.mubr.f32.mxu0 0.0
    %280 = vmatmul.mubr.f32.gmra.mxu0 %v87
    %v281 = vpop.f32.mrf.mxu0
    %v282 = vadd.f32 0.0, %v281
    %v283 = vpop.f32.mrf.mxu0
    %v284 = vadd.f32 0.0, %v283
    %285 = vmatprep.mubr.f32.mxu0 0.0
    %286 = vmatmul.mubr.f32.gmra.mxu0 %v90
    %v287 = vpop.f32.mrf.mxu0
    %v288 = vadd.f32 0.0, %v287
    %v289 = vpop.f32.mrf.mxu0
    %v290 = vadd.f32 0.0, %v289
    %291 = vmatprep.mubr.f32.mxu0 0.0
    %292 = vmatmul.mubr.f32.gmra.mxu0 %v93
    %v293 = vpop.f32.mrf.mxu0
    %v294 = vadd.f32 0.0, %v293
    %v295 = vpop.f32.mrf.mxu0
    %v296 = vadd.f32 0.0, %v295
    %297 = vmatprep.mubr.f32.mxu0 0.0
    %298 = vmatmul.mubr.f32.gmra.mxu0 %v96
    %v299 = vpop.f32.mrf.mxu0
    %v300 = vadd.f32 0.0, %v299
    %v301 = vpop.f32.mrf.mxu0
    %v302 = vadd.f32 0.0, %v301
    %303 = vmatprep.mubr.f32.mxu0 0.0
    %304 = vmatmul.mubr.f32.gmra.mxu0 %v99
    %v305 = vpop.f32.mrf.mxu0
    %v306 = vadd.f32 0.0, %v305
    %v307 = vpop.f32.mrf.mxu0
    %v308 = vadd.f32 0.0, %v307
    %309 = vmatprep.mubr.f32.mxu0 0.0
    %310 = vmatmul.mubr.f32.gmra.mxu0 %v102
    %v311 = vpop.f32.mrf.mxu0
    %v312 = vadd.f32 0.0, %v311
    %v313 = vpop.f32.mrf.mxu0
    %v314 = vadd.f32 0.0, %v313
    %315 = vmatprep.mubr.f32.mxu0 0.0
    %316 = vmatmul.mubr.f32.gmra.mxu0 %v105
    %v317 = vpop.f32.mrf.mxu0
    %v318 = vadd.f32 0.0, %v317
    %v319 = vpop.f32.mrf.mxu0
    %v320 = vadd.f32 0.0, %v319
    %321 = vmatprep.mubr.f32.mxu0 0.0
    %322 = vmatmul.mubr.f32.gmra.mxu0 %v108
    %v323 = vpop.f32.mrf.mxu0
    %v324 = vadd.f32 0.0, %v323
    %v325 = vpop.f32.mrf.mxu0
    %v326 = vadd.f32 0.0, %v325
    %327 = vmatprep.mubr.f32.mxu0 0.0
    %328 = vmatmul.mubr.f32.gmra.mxu0 %v111
    %v329 = vpop.f32.mrf.mxu0
    %v330 = vadd.f32 0.0, %v329
    %v331 = vpop.f32.mrf.mxu0
    %v332 = vadd.f32 0.0, %v331
    %333 = vmatprep.mubr.f32.mxu0 0.0
    %334 = vmatmul.mubr.f32.gmra.mxu0 %v114
    %v335 = vpop.f32.mrf.mxu0
    %v336 = vadd.f32 0.0, %v335
    %v337 = vpop.f32.mrf.mxu0
    %v338 = vadd.f32 0.0, %v337
    %339 = vmatprep.mubr.f32.mxu0 0.0
    %340 = vmatmul.mubr.f32.gmra.mxu0 %v117
    %v341 = vpop.f32.mrf.mxu0
    %v342 = vadd.f32 0.0, %v341
    %v343 = vpop.f32.mrf.mxu0
    %v344 = vadd.f32 0.0, %v343
    %345 = vmatprep.mubr.f32.mxu0 0.0
    %346 = vmatmul.mubr.f32.gmra.mxu0 %v120
    %v347 = vpop.f32.mrf.mxu0
    %v348 = vadd.f32 0.0, %v347
    %v349 = vpop.f32.mrf.mxu0
    %v350 = vadd.f32 0.0, %v349
    %351 = vmatprep.mubr.f32.mxu0 0.0
    %352 = vmatmul.mubr.f32.gmra.mxu0 %v123
    %v353 = vpop.f32.mrf.mxu0
    %v354 = vadd.f32 0.0, %v353
    %v355 = vpop.f32.mrf.mxu0
    %v356 = vadd.f32 0.0, %v355
    %357 = vmatprep.mubr.f32.mxu0 0.0
    %358 = vmatmul.mubr.f32.gmra.mxu0 %v126
    %v359 = vpop.f32.mrf.mxu0
    %v360 = vadd.f32 0.0, %v359
    %v361 = vpop.f32.mrf.mxu0
    %v362 = vadd.f32 0.0, %v361
    %363 = vmatprep.mubr.f32.mxu0 0.0
    %364 = vmatmul.mubr.f32.gmra.mxu0 %v129
    %v365 = vpop.f32.mrf.mxu0
    %v366 = vadd.f32 0.0, %v365
    %v367 = vpop.f32.mrf.mxu0
    %v368 = vadd.f32 0.0, %v367
    %369 = vmatprep.mubr.f32.mxu0 0.0
    %370 = vmatmul.mubr.f32.gmra.mxu0 %v132
    %v371 = vpop.f32.mrf.mxu0
    %v372 = vadd.f32 0.0, %v371
    %v373 = vpop.f32.mrf.mxu0
    %v374 = vadd.f32 0.0, %v373
    %375 = vmatprep.mubr.f32.mxu0 0.0
    %376 = vmatmul.mubr.f32.gmra.mxu0 %v135
    %v377 = vpop.f32.mrf.mxu0
    %v378 = vadd.f32 0.0, %v377
    %v379 = vpop.f32.mrf.mxu0
    %v380 = vadd.f32 0.0, %v379
    %381 = vmatprep.mubr.f32.mxu0 0.0
    %382 = vmatmul.mubr.f32.gmra.mxu0 %v138
    %v383 = vpop.f32.mrf.mxu0
    %v384 = vadd.f32 0.0, %v383
    %v385 = vpop.f32.mrf.mxu0
    %v386 = vadd.f32 0.0, %v385
    %387 = vmatprep.mubr.f32.mxu0 0.0
    %388 = vmatmul.mubr.f32.gmra.mxu0 %v141
    %v389 = vpop.f32.mrf.mxu0
    %v390 = vadd.f32 0.0, %v389
    %v391 = vpop.f32.mrf.mxu0
    %v392 = vadd.f32 0.0, %v391
    %393 = vmatprep.mubr.f32.mxu0 0.0
    %394 = vmatmul.mubr.f32.gmra.mxu0 %v144
    %v395 = vpop.f32.mrf.mxu0
    %v396 = vadd.f32 0.0, %v395
    %v397 = vpop.f32.mrf.mxu0
    %v398 = vadd.f32 0.0, %v397
    %399 = vmatprep.mubr.f32.mxu0 0.0
    %400 = vmatmul.mubr.f32.gmra.mxu0 %v147
    %v401 = vpop.f32.mrf.mxu0
    %v402 = vadd.f32 0.0, %v401
    %v403 = vpop.f32.mrf.mxu0
    %v404 = vadd.f32 0.0, %v403
    %405 = vdwg.mxu0
    %v406 = vmul.f32 %v216, 0.5
    %v407 = vmul.f32 %v218, 0.5
    %v408 = vmul.f32 %v222, 0.5
    %v409 = vmul.f32 %v224, 0.5
    %v410 = vmul.f32 %v228, 0.5
    %v411 = vmul.f32 %v230, 0.5
    %v412 = vmul.f32 %v234, 0.5
    %v413 = vmul.f32 %v236, 0.5
    %v414 = vmul.f32 %v240, 0.5
    %v415 = vmul.f32 %v242, 0.5
    %v416 = vmul.f32 %v246, 0.5
    %v417 = vmul.f32 %v248, 0.5
    %v418 = vmul.f32 %v252, 0.5
    %v419 = vmul.f32 %v254, 0.5
    %v420 = vmul.f32 %v258, 0.5
    %v421 = vmul.f32 %v260, 0.5
    %v422 = vmul.f32 %v264, 0.5
    %v423 = vmul.f32 %v266, 0.5
    %v424 = vmul.f32 %v270, 0.5
    %v425 = vmul.f32 %v272, 0.5
    %v426 = vmul.f32 %v276, 0.5
    %v427 = vmul.f32 %v278, 0.5
    %v428 = vmul.f32 %v282, 0.5
    %v429 = vmul.f32 %v284, 0.5
    %v430 = vmul.f32 %v288, 0.5
    %v431 = vmul.f32 %v290, 0.5
    %v432 = vmul.f32 %v294, 0.5
    %v433 = vmul.f32 %v296, 0.5
    %v434 = vmul.f32 %v300, 0.5
    %v435 = vmul.f32 %v302, 0.5
    %v436 = vmul.f32 %v306, 0.5
    %v437 = vmul.f32 %v308, 0.5
    %v438 = vmul.f32 %v312, 0.5
    %v439 = vmul.f32 %v314, 0.5
    %v440 = vmul.f32 %v318, 0.5
    %v441 = vmul.f32 %v320, 0.5
    %v442 = vmul.f32 %v324, 0.5
    %v443 = vmul.f32 %v326, 0.5
    %v444 = vmul.f32 %v330, 0.5
    %v445 = vmul.f32 %v332, 0.5
    %v446 = vmul.f32 %v336, 0.5
    %v447 = vmul.f32 %v338, 0.5
    %v448 = vmul.f32 %v342, 0.5
    %v449 = vmul.f32 %v344, 0.5
    %v450 = vmul.f32 %v348, 0.5
    %v451 = vmul.f32 %v350, 0.5
    %v452 = vmul.f32 %v354, 0.5
    %v453 = vmul.f32 %v356, 0.5
    %v454 = vmul.f32 %v360, 0.5
    %v455 = vmul.f32 %v362, 0.5
    %v456 = vmul.f32 %v366, 0.5
    %v457 = vmul.f32 %v368, 0.5
    %v458 = vmul.f32 %v372, 0.5
    %v459 = vmul.f32 %v374, 0.5
    %v460 = vmul.f32 %v378, 0.5
    %v461 = vmul.f32 %v380, 0.5
    %v462 = vmul.f32 %v384, 0.5
    %v463 = vmul.f32 %v386, 0.5
    %v464 = vmul.f32 %v390, 0.5
    %v465 = vmul.f32 %v392, 0.5
    %v466 = vmul.f32 %v396, 0.5
    %v467 = vmul.f32 %v398, 0.5
    %v468 = vmul.f32 %v402, 0.5
    %v469 = vmul.f32 %v404, 0.5
    %v470 = vtanh.pop %v406
    %v471 = vtanh.pop %v407
    %v472 = vtanh.pop %v408
    %v473 = vtanh.pop %v409
    %v474 = vtanh.pop %v410
    %v475 = vtanh.pop %v411
    %v476 = vtanh.pop %v412
    %v477 = vtanh.pop %v413
    %v478 = vtanh.pop %v414
    %v479 = vtanh.pop %v415
    %v480 = vtanh.pop %v416
    %v481 = vtanh.pop %v417
    %v482 = vtanh.pop %v418
    %v483 = vtanh.pop %v419
    %v484 = vtanh.pop %v420
    %v485 = vtanh.pop %v421
    %v486 = vtanh.pop %v422
    %v487 = vtanh.pop %v423
    %v488 = vtanh.pop %v424
    %v489 = vtanh.pop %v425
    %v490 = vtanh.pop %v426
    %v491 = vtanh.pop %v427
    %v492 = vtanh.pop %v428
    %v493 = vtanh.pop %v429
    %v494 = vtanh.pop %v430
    %v495 = vtanh.pop %v431
    %v496 = vtanh.pop %v432
    %v497 = vtanh.pop %v433
    %v498 = vtanh.pop %v434
    %v499 = vtanh.pop %v435
    %v500 = vtanh.pop %v436
    %v501 = vtanh.pop %v437
    %v502 = vtanh.pop %v438
    %v503 = vtanh.pop %v439
    %v504 = vtanh.pop %v440
    %v505 = vtanh.pop %v441
    %v506 = vtanh.pop %v442
    %v507 = vtanh.pop %v443
    %v508 = vtanh.pop %v444
    %v509 = vtanh.pop %v445
    %v510 = vtanh.pop %v446
    %v511 = vtanh.pop %v447
    %v512 = vtanh.pop %v448
    %v513 = vtanh.pop %v449
    %v514 = vtanh.pop %v450
    %v515 = vtanh.pop %v451
    %v516 = vtanh.pop %v452
    %v517 = vtanh.pop %v453
    %v518 = vtanh.pop %v454
    %v519 = vtanh.pop %v455
    %v520 = vtanh.pop %v456
    %v521 = vtanh.pop %v457
    %v522 = vtanh.pop %v458
    %v523 = vtanh.pop %v459
    %v524 = vtanh.pop %v460
    %v525 = vtanh.pop %v461
    %v526 = vtanh.pop %v462
    %v527 = vtanh.pop %v463
    %v528 = vtanh.pop %v464
    %v529 = vtanh.pop %v465
    %v530 = vtanh.pop %v466
    %v531 = vtanh.pop %v467
    %v532 = vtanh.pop %v468
    %v533 = vtanh.pop %v469
    %v534 = vadd.f32 %v470, 1.0
    %v535 = vadd.f32 %v471, 1.0
    %v536 = vadd.f32 %v472, 1.0
    %v537 = vadd.f32 %v473, 1.0
    %v538 = vadd.f32 %v474, 1.0
    %v539 = vadd.f32 %v475, 1.0
    %v540 = vadd.f32 %v476, 1.0
    %v541 = vadd.f32 %v477, 1.0
    %v542 = vadd.f32 %v478, 1.0
    %v543 = vadd.f32 %v479, 1.0
    %v544 = vadd.f32 %v480, 1.0
    %v545 = vadd.f32 %v481, 1.0
    %v546 = vadd.f32 %v482, 1.0
    %v547 = vadd.f32 %v483, 1.0
    %v548 = vadd.f32 %v484, 1.0
    %v549 = vadd.f32 %v485, 1.0
    %v550 = vadd.f32 %v486, 1.0
    %v551 = vadd.f32 %v487, 1.0
    %v552 = vadd.f32 %v488, 1.0
    %v553 = vadd.f32 %v489, 1.0
    %v554 = vadd.f32 %v490, 1.0
    %v555 = vadd.f32 %v491, 1.0
    %v556 = vadd.f32 %v492, 1.0
    %v557 = vadd.f32 %v493, 1.0
    %v558 = vadd.f32 %v494, 1.0
    %v559 = vadd.f32 %v495, 1.0
    %v560 = vadd.f32 %v496, 1.0
    %v561 = vadd.f32 %v497, 1.0
    %v562 = vadd.f32 %v498, 1.0
    %v563 = vadd.f32 %v499, 1.0
    %v564 = vadd.f32 %v500, 1.0
    %v565 = vadd.f32 %v501, 1.0
    %v566 = vadd.f32 %v502, 1.0
    %v567 = vadd.f32 %v503, 1.0
    %v568 = vadd.f32 %v504, 1.0
    %v569 = vadd.f32 %v505, 1.0
    %v570 = vadd.f32 %v506, 1.0
    %v571 = vadd.f32 %v507, 1.0
    %v572 = vadd.f32 %v508, 1.0
    %v573 = vadd.f32 %v509, 1.0
    %v574 = vadd.f32 %v510, 1.0
    %v575 = vadd.f32 %v511, 1.0
    %v576 = vadd.f32 %v512, 1.0
    %v577 = vadd.f32 %v513, 1.0
    %v578 = vadd.f32 %v514, 1.0
    %v579 = vadd.f32 %v515, 1.0
    %v580 = vadd.f32 %v516, 1.0
    %v581 = vadd.f32 %v517, 1.0
    %v582 = vadd.f32 %v518, 1.0
    %v583 = vadd.f32 %v519, 1.0
    %v584 = vadd.f32 %v520, 1.0
    %v585 = vadd.f32 %v521, 1.0
    %v586 = vadd.f32 %v522, 1.0
    %v587 = vadd.f32 %v523, 1.0
    %v588 = vadd.f32 %v524, 1.0
    %v589 = vadd.f32 %v525, 1.0
    %v590 = vadd.f32 %v526, 1.0
    %v591 = vadd.f32 %v527, 1.0
    %v592 = vadd.f32 %v528, 1.0
    %v593 = vadd.f32 %v529, 1.0
    %v594 = vadd.f32 %v530, 1.0
    %v595 = vadd.f32 %v531, 1.0
    %v596 = vadd.f32 %v532, 1.0
    %v597 = vadd.f32 %v533, 1.0
    %v598 = vmul.f32 %v534, 0.5
    %v599 = vmul.f32 %v535, 0.5
    %v600 = vmul.f32 %v536, 0.5
    %v601 = vmul.f32 %v537, 0.5
    %v602 = vmul.f32 %v538, 0.5
    %v603 = vmul.f32 %v539, 0.5
    %v604 = vmul.f32 %v540, 0.5
    %v605 = vmul.f32 %v541, 0.5
    %v606 = vmul.f32 %v542, 0.5
    %v607 = vmul.f32 %v543, 0.5
    %v608 = vmul.f32 %v544, 0.5
    %v609 = vmul.f32 %v545, 0.5
    %v610 = vmul.f32 %v546, 0.5
    %v611 = vmul.f32 %v547, 0.5
    %v612 = vmul.f32 %v548, 0.5
    %v613 = vmul.f32 %v549, 0.5
    %v614 = vmul.f32 %v550, 0.5
    %v615 = vmul.f32 %v551, 0.5
    %v616 = vmul.f32 %v552, 0.5
    %v617 = vmul.f32 %v553, 0.5
    %v618 = vmul.f32 %v554, 0.5
    %v619 = vmul.f32 %v555, 0.5
    %v620 = vmul.f32 %v556, 0.5
    %v621 = vmul.f32 %v557, 0.5
    %v622 = vmul.f32 %v558, 0.5
    %v623 = vmul.f32 %v559, 0.5
    %v624 = vmul.f32 %v560, 0.5
    %v625 = vmul.f32 %v561, 0.5
    %v626 = vmul.f32 %v562, 0.5
    %v627 = vmul.f32 %v563, 0.5
    %v628 = vmul.f32 %v564, 0.5
    %v629 = vmul.f32 %v565, 0.5
    %v630 = vmul.f32 %v566, 0.5
    %v631 = vmul.f32 %v567, 0.5
    %v632 = vmul.f32 %v568, 0.5
    %v633 = vmul.f32 %v569, 0.5
    %v634 = vmul.f32 %v570, 0.5
    %v635 = vmul.f32 %v571, 0.5
    %v636 = vmul.f32 %v572, 0.5
    %v637 = vmul.f32 %v573, 0.5
    %v638 = vmul.f32 %v574, 0.5
    %v639 = vmul.f32 %v575, 0.5
    %v640 = vmul.f32 %v576, 0.5
    %v641 = vmul.f32 %v577, 0.5
    %v642 = vmul.f32 %v578, 0.5
    %v643 = vmul.f32 %v579, 0.5
    %v644 = vmul.f32 %v580, 0.5
    %v645 = vmul.f32 %v581, 0.5
    %v646 = vmul.f32 %v582, 0.5
    %v647 = vmul.f32 %v583, 0.5
    %v648 = vmul.f32 %v584, 0.5
    %v649 = vmul.f32 %v585, 0.5
    %v650 = vmul.f32 %v586, 0.5
    %v651 = vmul.f32 %v587, 0.5
    %v652 = vmul.f32 %v588, 0.5
    %v653 = vmul.f32 %v589, 0.5
    %v654 = vmul.f32 %v590, 0.5
    %v655 = vmul.f32 %v591, 0.5
    %v656 = vmul.f32 %v592, 0.5
    %v657 = vmul.f32 %v593, 0.5
    %v658 = vmul.f32 %v594, 0.5
    %v659 = vmul.f32 %v595, 0.5
    %v660 = vmul.f32 %v596, 0.5
    %v661 = vmul.f32 %v597, 0.5
    %662 = vst [vmem:[#allocation2] sm:$0xff] %v598
    %663 = vst [vmem:[#allocation2 + $0x8] sm:$0xff] %v599
    %664 = vst [vmem:[#allocation2 + $0x10] sm:$0xff] %v600
    %665 = vst [vmem:[#allocation2 + $0x18] sm:$0xff] %v601
    %666 = vst [vmem:[#allocation2 + $0x20] sm:$0xff] %v602
    %667 = vst [vmem:[#allocation2 + $0x28] sm:$0xff] %v603
    %668 = vst [vmem:[#allocation2 + $0x30] sm:$0xff] %v604
    %669 = vst [vmem:[#allocation2 + $0x38] sm:$0xff] %v605
    %670 = vst [vmem:[#allocation2 + $0x40] sm:$0xff] %v606
    %671 = vst [vmem:[#allocation2 + $0x48] sm:$0xff] %v607
    %672 = vst [vmem:[#allocation2 + $0x50] sm:$0xff] %v608
    %673 = vst [vmem:[#allocation2 + $0x58] sm:$0xff] %v609
    %674 = vst [vmem:[#allocation2 + $0x60] sm:$0xff] %v610
    %675 = vst [vmem:[#allocation2 + $0x68] sm:$0xff] %v611
    %676 = vst [vmem:[#allocation2 + $0x70] sm:$0xff] %v612
    %677 = vst [vmem:[#allocation2 + $0x78] sm:$0xff] %v613
    %678 = vst [vmem:[#allocation2 + $0x80] sm:$0xff] %v614
    %679 = vst [vmem:[#allocation2 + $0x88] sm:$0xff] %v615
    %680 = vst [vmem:[#allocation2 + $0x90] sm:$0xff] %v616
    %681 = vst [vmem:[#allocation2 + $0x98] sm:$0xff] %v617
    %682 = vst [vmem:[#allocation2 + $0xa0] sm:$0xff] %v618
    %683 = vst [vmem:[#allocation2 + $0xa8] sm:$0xff] %v619
    %684 = vst [vmem:[#allocation2 + $0xb0] sm:$0xff] %v620
    %685 = vst [vmem:[#allocation2 + $0xb8] sm:$0xff] %v621
    %686 = vst [vmem:[#allocation2 + $0xc0] sm:$0xff] %v622
    %687 = vst [vmem:[#allocation2 + $0xc8] sm:$0xff] %v623
    %688 = vst [vmem:[#allocation2 + $0xd0] sm:$0xff] %v624
    %689 = vst [vmem:[#allocation2 + $0xd8] sm:$0xff] %v625
    %690 = vst [vmem:[#allocation2 + $0xe0] sm:$0xff] %v626
    %691 = vst [vmem:[#allocation2 + $0xe8] sm:$0xff] %v627
    %692 = vst [vmem:[#allocation2 + $0xf0] sm:$0xff] %v628
    %693 = vst [vmem:[#allocation2 + $0xf8] sm:$0xff] %v629
    %694 = vst [vmem:[#allocation2 + $0x100] sm:$0xff] %v630
    %695 = vst [vmem:[#allocation2 + $0x108] sm:$0xff] %v631
    %696 = vst [vmem:[#allocation2 + $0x110] sm:$0xff] %v632
    %697 = vst [vmem:[#allocation2 + $0x118] sm:$0xff] %v633
    %698 = vst [vmem:[#allocation2 + $0x120] sm:$0xff] %v634
    %699 = vst [vmem:[#allocation2 + $0x128] sm:$0xff] %v635
    %700 = vst [vmem:[#allocation2 + $0x130] sm:$0xff] %v636
    %701 = vst [vmem:[#allocation2 + $0x138] sm:$0xff] %v637
    %702 = vst [vmem:[#allocation2 + $0x140] sm:$0xff] %v638
    %703 = vst [vmem:[#allocation2 + $0x148] sm:$0xff] %v639
    %704 = vst [vmem:[#allocation2 + $0x150] sm:$0xff] %v640
    %705 = vst [vmem:[#allocation2 + $0x158] sm:$0xff] %v641
    %706 = vst [vmem:[#allocation2 + $0x160] sm:$0xff] %v642
    %707 = vst [vmem:[#allocation2 + $0x168] sm:$0xff] %v643
    %708 = vst [vmem:[#allocation2 + $0x170] sm:$0xff] %v644
    %709 = vst [vmem:[#allocation2 + $0x178] sm:$0xff] %v645
    %710 = vst [vmem:[#allocation2 + $0x180] sm:$0xff] %v646
    %711 = vst [vmem:[#allocation2 + $0x188] sm:$0xff] %v647
    %712 = vst [vmem:[#allocation2 + $0x190] sm:$0xff] %v648
    %713 = vst [vmem:[#allocation2 + $0x198] sm:$0xff] %v649
    %714 = vst [vmem:[#allocation2 + $0x1a0] sm:$0xff] %v650
    %715 = vst [vmem:[#allocation2 + $0x1a8] sm:$0xff] %v651
    %716 = vst [vmem:[#allocation2 + $0x1b0] sm:$0xff] %v652
    %717 = vst [vmem:[#allocation2 + $0x1b8] sm:$0xff] %v653
    %718 = vst [vmem:[#allocation2 + $0x1c0] sm:$0xff] %v654
    %719 = vst [vmem:[#allocation2 + $0x1c8] sm:$0xff] %v655
    %720 = vst [vmem:[#allocation2 + $0x1d0] sm:$0xff] %v656
    %721 = vst [vmem:[#allocation2 + $0x1d8] sm:$0xff] %v657
    %722 = vst [vmem:[#allocation2 + $0x1e0] sm:$0xff] %v658
    %723 = vst [vmem:[#allocation2 + $0x1e8] sm:$0xff] %v659
    %724 = vst [vmem:[#allocation2 + $0x1f0] sm:$0xff] %v660
    %725 = vst [vmem:[#allocation2 + $0x1f8] sm:$0xff] %v661
    // Predicated region
    $region10: #{inner_product_decoder.1} parent=1 // pred_check
      _
    $region11: #{inner_product_decoder.1} parent=1 // pred_check_branch
      %727 = sbr.rel (0) target = $region13
    $region12: #{inner_product_decoder.1} parent=1 // pred_region
      %s729 = ssub.s32 8192, 8192
      %730 = vsyncadd [#allocation3], %s729
      %s731 = sshll.u32 [#allocation2], 4
      %s732 = int_to_ptr.vmem [resolvable:$true] %s731
      %737 = dma.vmem_to_hbm [thread:$0]  %s732, 8192, %s2, [#allocation3], 256, 256, 16
    $region13: #{inner_product_decoder.1} parent=1 // pred_fallthru
      _
    // Predicated region
    $region14: #{inner_product_decoder.1} parent=1 // pred_check
      _
    $region15: #{inner_product_decoder.1} parent=1 // pred_check_branch
      %739 = sbr.rel (0) target = $region17
    $region16: #{inner_product_decoder.1} parent=1 // pred_region
      %740 = dma.done [#allocation3], 8192
    $region17: #{inner_product_decoder.1} parent=1 // pred_fallthru
      _
    %741 = vsyncpa [#allocation3], 1

</llo_original>
